<compile_context>
chip_gen: v5e
topology: v5e:2x2
jax: 0.10.0
libtpu: 0.0.40
codegen_flags: <defaults>
</compile_context>

<pallas_src>
import functools

import jax
import jax.numpy as jnp
from jax.experimental import pallas as pl
from jax.experimental.pallas import tpu as pltpu


NEG_INF = -1e30                    # large finite negative: exp() -> 0 without inf-inf NaNs
VMEM_LIMIT = 32 * 1024 * 1024      # safe scoped-VMEM request on v5e / v6e / v7x


# --------------------------------------------------------------------------------------
# Kernel A: fused QKV projection.  grid = (B, T-tiles).
#   w_ref is the (d_in, 3*d_out) slab [Q heads | K heads | V heads], Q pre-scaled by
#   1/sqrt(head_dim).  One wide matmul per tile; per-head writes are static lane slices
#   done once per tile (outside the attention hot loop).
# --------------------------------------------------------------------------------------
def qkv_proj_kernel(x_ref, w_ref, q_ref, k_ref, v_ref, *, num_heads, head_dim):
    x = x_ref[0]                                                    # (bq, d_in)
    qkv = jnp.dot(x, w_ref[...], preferred_element_type=jnp.float32)  # (bq, 3*d_out)
    d_out = num_heads * head_dim
    for p, o_ref in enumerate((q_ref, k_ref, v_ref)):
        for h in range(num_heads):
            c0 = p * d_out + h * head_dim
            o_ref[0, h] = qkv[:, c0:c0 + head_dim].astype(o_ref.dtype)


# --------------------------------------------------------------------------------------
# Kernel B: flash attention, online softmax, causal DMA+compute skip.
# --------------------------------------------------------------------------------------
def flash_attn_kernel(q_ref, k_ref, v_ref, o_ref, m_sc, l_sc, acc_sc,
                      *, block_q, block_kv, approx_recip):
    qi = pl.program_id(2)
    ki = pl.program_id(3)

    @pl.when(ki == 0)
    def _():
        m_sc[...] = jnp.full(m_sc.shape, NEG_INF, m_sc.dtype)
        l_sc[...] = jnp.zeros(l_sc.shape, l_sc.dtype)
        acc_sc[...] = jnp.zeros(acc_sc.shape, acc_sc.dtype)

    q_start = qi * block_q
    kv_start = ki * block_kv

    def step(masked):
        q = q_ref[0, 0]                            # (bq, hd)  (already scaled by 1/sqrt(hd))
        k = k_ref[0, 0]                            # (bk, hd)
        v = v_ref[0, 0]                            # (bk, hd)
        # s = q @ k^T via dimension_numbers (no explicit transpose).
        s = jax.lax.dot_general(
            q, k, dimension_numbers=(((1,), (1,)), ((), ())),
            preferred_element_type=jnp.float32)    # (bq, bk), f32 stats
        if masked:
            row = q_start + jax.lax.broadcasted_iota(jnp.int32, (block_q, block_kv), 0)
            col = kv_start + jax.lax.broadcasted_iota(jnp.int32, (block_q, block_kv), 1)
            s = jnp.where(col > row, NEG_INF, s)
        m_prev = m_sc[...]
        m_new = jnp.maximum(m_prev, jnp.max(s, axis=-1, keepdims=True))
        alpha = jnp.exp(m_prev - m_new)
        p = jnp.exp(s - m_new)
        l_sc[...] = alpha * l_sc[...] + jnp.sum(p, axis=-1, keepdims=True)
        acc_sc[...] = alpha * acc_sc[...] + jnp.dot(
            p.astype(v.dtype), v, preferred_element_type=jnp.float32)
        m_sc[...] = m_new

    # kv tile entirely below the diagonal: mask-free fast path.
    @pl.when(kv_start + block_kv - 1 <= q_start)
    def _():
        step(masked=False)

    # kv tile straddling the diagonal: apply the causal mask.
    @pl.when(jnp.logical_and(kv_start + block_kv - 1 > q_start,
                             kv_start <= q_start + block_q - 1))
    def _():
        step(masked=True)

    # kv tiles fully above the diagonal run neither branch (and their DMA is skipped by
    # the clamped K/V index_map in the wrapper).

    @pl.when(ki == pl.num_programs(3) - 1)
    def _():
        inv_l = pl.reciprocal(l_sc[...], approx=approx_recip)
        o_ref[0, 0] = (acc_sc[...] * inv_l).astype(o_ref.dtype)


# --------------------------------------------------------------------------------------
# Kernel C: output projection with fused head-merge (unrolled per-head accumulation).
# --------------------------------------------------------------------------------------
def out_proj_kernel(ctx_ref, wo_ref, bo_ref, o_ref, *, num_heads):
    # TODO(synk): for production d_out, add grid axes tiling d_out (N) and H*hd (K)
    #             instead of loading the full (H, hd, d_out) weight slab.
    acc = jnp.dot(ctx_ref[0, 0], wo_ref[0], preferred_element_type=jnp.float32)
    for h in range(1, num_heads):
        acc = acc + jnp.dot(ctx_ref[0, h], wo_ref[h], preferred_element_type=jnp.float32)
    o_ref[0] = (acc + bo_ref[...]).astype(o_ref.dtype)


# --------------------------------------------------------------------------------------
# Wrapper
# --------------------------------------------------------------------------------------
def multi_head_attention(x, wq, wk, wv, wo, bo, *, num_heads,
                         block_q=128, block_kv=128, compute_dtype=None):
    B, T, d_in = x.shape
    d_out = wq.shape[1]
    assert d_out % num_heads == 0, "d_out must be divisible by num_heads"
    hd = d_out // num_heads
    cdt = jnp.dtype(compute_dtype) if compute_dtype is not None else jnp.dtype(x.dtype)
    approx_recip = (cdt == jnp.dtype(jnp.bfloat16))

    bq = min(block_q, T)
    bk = min(block_kv, T)
    assert T % bq == 0 and T % bk == 0, "T must be divisible by the tile sizes"
    nq, nk = T // bq, T // bk
    scale = 1.0 / (hd ** 0.5)

    xc = x.astype(cdt)
    # Fused QKV weight slab; fold the 1/sqrt(hd) scale into the Q columns once.
    w_fused = jnp.concatenate(
        [jnp.asarray(wq, jnp.float32) * scale,
         jnp.asarray(wk, jnp.float32),
         jnp.asarray(wv, jnp.float32)], axis=1).astype(cdt)          # (d_in, 3*d_out)
    wo_r = wo.reshape(num_heads, hd, d_out).astype(cdt)              # (H, hd, d_out)
    bo_r = jnp.asarray(bo, jnp.float32).reshape(1, d_out)

    # ---- Kernel A: fused QKV projection -> Q/K/V in (B, H, T, hd) ---------------------
    qkv_shape = jax.ShapeDtypeStruct((B, num_heads, T, hd), cdt)
    kernel_a = functools.partial(qkv_proj_kernel, num_heads=num_heads, head_dim=hd)
    q, k, v = pl.pallas_call(
        kernel_a,
        out_shape=(qkv_shape, qkv_shape, qkv_shape),
        grid=(B, nq),
        in_specs=[
            pl.BlockSpec((1, bq, d_in), lambda b, t: (b, t, 0)),
            pl.BlockSpec((d_in, 3 * d_out), lambda b, t: (0, 0)),
        ],
        out_specs=(
            pl.BlockSpec((1, num_heads, bq, hd), lambda b, t: (b, 0, t, 0)),
            pl.BlockSpec((1, num_heads, bq, hd), lambda b, t: (b, 0, t, 0)),
            pl.BlockSpec((1, num_heads, bq, hd), lambda b, t: (b, 0, t, 0)),
        ),
        compiler_params=pltpu.CompilerParams(
            dimension_semantics=("parallel", "parallel"),
            vmem_limit_bytes=VMEM_LIMIT),
    )(xc, w_fused)

    # ---- Kernel B: flash attention -----------------------------------------------------
    def kv_index_map(b, h, qi, ki):
        # Clamp to the causal diagonal: kv tiles entirely above the diagonal alias the
        # already-resident diagonal block, so no DMA is issued for skipped steps.
        diag = (qi * bq + bq - 1) // bk
        return (b, h, jnp.minimum(ki, diag), 0)

    flash = functools.partial(flash_attn_kernel, block_q=bq, block_kv=bk,
                              approx_recip=approx_recip)
    ctx = pl.pallas_call(
        flash,
        out_shape=jax.ShapeDtypeStruct((B, num_heads, T, hd), cdt),
        grid=(B, num_heads, nq, nk),
        in_specs=[
            pl.BlockSpec((1, 1, bq, hd), lambda b, h, qi, ki: (b, h, qi, 0)),
            pl.BlockSpec((1, 1, bk, hd), kv_index_map),
            pl.BlockSpec((1, 1, bk, hd), kv_index_map),
        ],
        out_specs=pl.BlockSpec((1, 1, bq, hd), lambda b, h, qi, ki: (b, h, qi, 0)),
        scratch_shapes=[
            pltpu.VMEM((bq, 1), jnp.float32),    # running max
            pltpu.VMEM((bq, 1), jnp.float32),    # running denom
            pltpu.VMEM((bq, hd), jnp.float32),   # running accumulator
        ],
        compiler_params=pltpu.CompilerParams(
            dimension_semantics=("parallel", "parallel", "parallel", "arbitrary"),
            vmem_limit_bytes=VMEM_LIMIT),
    )(q, k, v)

    # ---- Kernel C: output projection (head-merge fused) -------------------------------
    kernel_c = functools.partial(out_proj_kernel, num_heads=num_heads)
    out = pl.pallas_call(
        kernel_c,
        out_shape=jax.ShapeDtypeStruct((B, T, d_out), x.dtype),
        grid=(B, nq),
        in_specs=[
            pl.BlockSpec((1, num_heads, bq, hd), lambda b, t: (b, 0, t, 0)),
            pl.BlockSpec((num_heads, hd, d_out), lambda b, t: (0, 0, 0)),
            pl.BlockSpec((1, d_out), lambda b, t: (0, 0)),
        ],
        out_specs=pl.BlockSpec((1, bq, d_out), lambda b, t: (b, t, 0)),
        compiler_params=pltpu.CompilerParams(
            dimension_semantics=("parallel", "parallel"),
            vmem_limit_bytes=VMEM_LIMIT),
    )(ctx, wo_r, bo_r)
    return out


# --------------------------------------------------------------------------------------
# Pure-JAX reference mirroring the PyTorch forward (high-precision matmuls).
# --------------------------------------------------------------------------------------
def reference_mha(x, wq, wk, wv, wo, bo, *, num_heads):
    B, T, d_in = x.shape
    d_out = wq.shape[1]
    hd = d_out // num_heads
    with jax.default_matmul_precision("highest"):
        q = x @ wq
        k = x @ wk
        v = x @ wv
        q = q.reshape(B, T, num_heads, hd).transpose(0, 2, 1, 3)
        k = k.reshape(B, T, num_heads, hd).transpose(0, 2, 1, 3)
        v = v.reshape(B, T, num_heads, hd).transpose(0, 2, 1, 3)
        s = jnp.einsum("bhtd,bhsd->bhts", q, k)
        mask = jnp.triu(jnp.ones((T, T), dtype=bool), k=1)
        s = jnp.where(mask, -jnp.inf, s)
        w = jax.nn.softmax(s / (hd ** 0.5), axis=-1)
        ctx = jnp.einsum("bhts,bhsd->bhtd", w, v).transpose(0, 2, 1, 3).reshape(B, T, d_out)
        return ctx @ wo + bo


if __name__ == "__main__":
    # --- Test 1: exact shapes from the PyTorch script (B=2, T=6, d_in=3, d_out=2, H=2) ---
    inputs = jnp.array(
        [[0.43, 0.15, 0.89],
         [0.55, 0.87, 0.66],
         [0.57, 0.85, 0.64],
         [0.22, 0.58, 0.33],
         [0.77, 0.25, 0.10],
         [0.05, 0.80, 0.55]], dtype=jnp.float32)
    x1 = jnp.stack((inputs, inputs), axis=0)          # (2, 6, 3)
    d_in, d_out, H = 3, 2, 2

    key = jax.random.PRNGKey(0)
    k1, k2, k3, k4, k5 = jax.random.split(key, 5)
    wq = jax.random.uniform(k1, (d_in, d_out), jnp.float32, -0.5, 0.5)
    wk = jax.random.uniform(k2, (d_in, d_out), jnp.float32, -0.5, 0.5)
    wv = jax.random.uniform(k3, (d_in, d_out), jnp.float32, -0.5, 0.5)
    wo = jax.random.uniform(k4, (d_out, d_out), jnp.float32, -0.5, 0.5)
    bo = jax.random.uniform(k5, (d_out,), jnp.float32, -0.5, 0.5)

    out1 = jax.block_until_ready(multi_head_attention(x1, wq, wk, wv, wo, bo, num_heads=H))
    ref1 = reference_mha(x1, wq, wk, wv, wo, bo, num_heads=H)
    assert out1.shape == (2, 6, d_out)
    assert jnp.allclose(out1, ref1, atol=2e-3, rtol=2e-3), (out1, ref1)

    # --- Test 2: larger shapes exercising the multi-tile flash path (2 q x 2 kv tiles) ---
    B2, T2, d_in2, d_out2, H2 = 2, 128, 32, 64, 4
    ks = jax.random.split(jax.random.PRNGKey(0), 6)
    x2 = jax.random.uniform(ks[0], (B2, T2, d_in2), jnp.float32, -0.5, 0.5)
    wq2 = jax.random.uniform(ks[1], (d_in2, d_out2), jnp.float32, -0.5, 0.5)
    wk2 = jax.random.uniform(ks[2], (d_in2, d_out2), jnp.float32, -0.5, 0.5)
    wv2 = jax.random.uniform(ks[3], (d_in2, d_out2), jnp.float32, -0.5, 0.5)
    wo2 = jax.random.uniform(ks[4], (d_out2, d_out2), jnp.float32, -0.5, 0.5)
    bo2 = jax.random.uniform(ks[5], (d_out2,), jnp.float32, -0.5, 0.5)

    out2 = jax.block_until_ready(
        multi_head_attention(x2, wq2, wk2, wv2, wo2, bo2,
                             num_heads=H2, block_q=64, block_kv=64))
    ref2 = reference_mha(x2, wq2, wk2, wv2, wo2, bo2, num_heads=H2)
    assert jnp.allclose(out2, ref2, atol=2e-3, rtol=2e-3), float(jnp.max(jnp.abs(out2 - ref2)))

    # --- Test 3: bf16 MXU operands with f32 accumulation / f32 softmax stats ---
    out3 = jax.block_until_ready(
        multi_head_attention(x2, wq2, wk2, wv2, wo2, bo2, num_heads=H2,
                             block_q=64, block_kv=64, compute_dtype=jnp.bfloat16))
    assert jnp.allclose(out3.astype(jnp.float32), ref2, atol=1e-1, rtol=1e-1)

    print("KERNEL_OK")
</pallas_src>

<mosaic_0001>
module attributes {stable_mosaic.version = 11 : i64} {
  func.func @qkv_proj_kernel(%arg0: i32, %arg1: i32, %arg2: memref<1x6x3xf32, #tpu.memory_space<vmem>>, %arg3: memref<3x6xf32, #tpu.memory_space<vmem>>, %arg4: memref<1x2x6x1xf32, #tpu.memory_space<vmem>>, %arg5: memref<1x2x6x1xf32, #tpu.memory_space<vmem>>, %arg6: memref<1x2x6x1xf32, #tpu.memory_space<vmem>>) attributes {dimension_semantics = [#tpu.dimension_semantics<parallel>, #tpu.dimension_semantics<parallel>], iteration_bounds = array<i64: 2, 1>, scalar_prefetch = 0 : i64, scratch_operands = 0 : i64, tpu.core_type = #tpu.core_type<tc>, window_params = [{transform_indices = @transform_0, window_bounds = array<i64: 1, 6, 3>}, {pipeline_mode = #tpu.pipeline_mode<synchronous>, transform_indices = @transform_1, window_bounds = array<i64: 3, 6>}, {transform_indices = @transform_2, window_bounds = array<i64: 1, 2, 6, 1>}, {transform_indices = @transform_3, window_bounds = array<i64: 1, 2, 6, 1>}, {transform_indices = @transform_4, window_bounds = array<i64: 1, 2, 6, 1>}]} {
    %c0 = arith.constant 0 : index
    %c0_0 = arith.constant 0 : index
    %c0_1 = arith.constant 0 : index
    %0 = vector.load %arg2[%c0, %c0_0, %c0_1] : memref<1x6x3xf32, #tpu.memory_space<vmem>>, vector<1x6x3xf32>
    %1 = vector.shape_cast %0 : vector<1x6x3xf32> to vector<6x3xf32>
    %c0_2 = arith.constant 0 : index
    %c0_3 = arith.constant 0 : index
    %2 = vector.load %arg3[%c0_2, %c0_3] : memref<3x6xf32, #tpu.memory_space<vmem>>, vector<3x6xf32>
    %cst = arith.constant dense<0.000000e+00> : vector<6x6xf32>
    %3 = tpu.matmul %1, %2, %cst {dimension_numbers = #tpu.dot_dimension_numbers<[1], [0], [0], [1], [0, 0, 1, 1], [], []>} : vector<6x3xf32>, vector<3x6xf32>, vector<6x6xf32> -> vector<6x6xf32>
    %4 = vector.extract_strided_slice %3 {offsets = [0, 0], sizes = [6, 1], strides = [1, 1]} : vector<6x6xf32> to vector<6x1xf32>
    %c0_4 = arith.constant 0 : index
    %c0_5 = arith.constant 0 : index
    %c0_6 = arith.constant 0 : index
    %c0_7 = arith.constant 0 : index
    %5 = vector.load %arg4[%c0_4, %c0_5, %c0_6, %c0_7] : memref<1x2x6x1xf32, #tpu.memory_space<vmem>>, vector<1x1x6x1xf32>
    %6 = vector.shape_cast %5 : vector<1x1x6x1xf32> to vector<6x1xf32>
    %7 = vector.shape_cast %4 : vector<6x1xf32> to vector<1x1x6x1xf32>
    tpu.vector_store %arg4[%c0_4, %c0_5, %c0_6, %c0_7], %7 {strides = array<i32>} : memref<1x2x6x1xf32, #tpu.memory_space<vmem>>, vector<1x1x6x1xf32>,
    %8 = vector.extract_strided_slice %3 {offsets = [0, 1], sizes = [6, 1], strides = [1, 1]} : vector<6x6xf32> to vector<6x1xf32>
    %c0_8 = arith.constant 0 : index
    %c1 = arith.constant 1 : index
    %c0_9 = arith.constant 0 : index
    %c0_10 = arith.constant 0 : index
    %9 = vector.load %arg4[%c0_8, %c1, %c0_9, %c0_10] : memref<1x2x6x1xf32, #tpu.memory_space<vmem>>, vector<1x1x6x1xf32>
    %10 = vector.shape_cast %9 : vector<1x1x6x1xf32> to vector<6x1xf32>
    %11 = vector.shape_cast %8 : vector<6x1xf32> to vector<1x1x6x1xf32>
    tpu.vector_store %arg4[%c0_8, %c1, %c0_9, %c0_10], %11 {strides = array<i32>} : memref<1x2x6x1xf32, #tpu.memory_space<vmem>>, vector<1x1x6x1xf32>,
    %12 = vector.extract_strided_slice %3 {offsets = [0, 2], sizes = [6, 1], strides = [1, 1]} : vector<6x6xf32> to vector<6x1xf32>
    %c0_11 = arith.constant 0 : index
    %c0_12 = arith.constant 0 : index
    %c0_13 = arith.constant 0 : index
    %c0_14 = arith.constant 0 : index
    %13 = vector.load %arg5[%c0_11, %c0_12, %c0_13, %c0_14] : memref<1x2x6x1xf32, #tpu.memory_space<vmem>>, vector<1x1x6x1xf32>
    %14 = vector.shape_cast %13 : vector<1x1x6x1xf32> to vector<6x1xf32>
    %15 = vector.shape_cast %12 : vector<6x1xf32> to vector<1x1x6x1xf32>
    tpu.vector_store %arg5[%c0_11, %c0_12, %c0_13, %c0_14], %15 {strides = array<i32>} : memref<1x2x6x1xf32, #tpu.memory_space<vmem>>, vector<1x1x6x1xf32>,
    %16 = vector.extract_strided_slice %3 {offsets = [0, 3], sizes = [6, 1], strides = [1, 1]} : vector<6x6xf32> to vector<6x1xf32>
    %c0_15 = arith.constant 0 : index
    %c1_16 = arith.constant 1 : index
    %c0_17 = arith.constant 0 : index
    %c0_18 = arith.constant 0 : index
    %17 = vector.load %arg5[%c0_15, %c1_16, %c0_17, %c0_18] : memref<1x2x6x1xf32, #tpu.memory_space<vmem>>, vector<1x1x6x1xf32>
    %18 = vector.shape_cast %17 : vector<1x1x6x1xf32> to vector<6x1xf32>
    %19 = vector.shape_cast %16 : vector<6x1xf32> to vector<1x1x6x1xf32>
    tpu.vector_store %arg5[%c0_15, %c1_16, %c0_17, %c0_18], %19 {strides = array<i32>} : memref<1x2x6x1xf32, #tpu.memory_space<vmem>>, vector<1x1x6x1xf32>,
    %20 = vector.extract_strided_slice %3 {offsets = [0, 4], sizes = [6, 1], strides = [1, 1]} : vector<6x6xf32> to vector<6x1xf32>
    %c0_19 = arith.constant 0 : index
    %c0_20 = arith.constant 0 : index
    %c0_21 = arith.constant 0 : index
    %c0_22 = arith.constant 0 : index
    %21 = vector.load %arg6[%c0_19, %c0_20, %c0_21, %c0_22] : memref<1x2x6x1xf32, #tpu.memory_space<vmem>>, vector<1x1x6x1xf32>
    %22 = vector.shape_cast %21 : vector<1x1x6x1xf32> to vector<6x1xf32>
    %23 = vector.shape_cast %20 : vector<6x1xf32> to vector<1x1x6x1xf32>
    tpu.vector_store %arg6[%c0_19, %c0_20, %c0_21, %c0_22], %23 {strides = array<i32>} : memref<1x2x6x1xf32, #tpu.memory_space<vmem>>, vector<1x1x6x1xf32>,
    %24 = vector.extract_strided_slice %3 {offsets = [0, 5], sizes = [6, 1], strides = [1, 1]} : vector<6x6xf32> to vector<6x1xf32>
    %c0_23 = arith.constant 0 : index
    %c1_24 = arith.constant 1 : index
    %c0_25 = arith.constant 0 : index
    %c0_26 = arith.constant 0 : index
    %25 = vector.load %arg6[%c0_23, %c1_24, %c0_25, %c0_26] : memref<1x2x6x1xf32, #tpu.memory_space<vmem>>, vector<1x1x6x1xf32>
    %26 = vector.shape_cast %25 : vector<1x1x6x1xf32> to vector<6x1xf32>
    %27 = vector.shape_cast %24 : vector<6x1xf32> to vector<1x1x6x1xf32>
    tpu.vector_store %arg6[%c0_23, %c1_24, %c0_25, %c0_26], %27 {strides = array<i32>} : memref<1x2x6x1xf32, #tpu.memory_space<vmem>>, vector<1x1x6x1xf32>,
    return
  }
  func.func @transform_0(%arg0: i32, %arg1: i32) -> (i32, i32, i32) {
    %c0_i32 = arith.constant 0 : i32
    %c0_i32_0 = arith.constant 0 : i32
    return %arg0, %arg1, %c0_i32 : i32, i32, i32
  }
  func.func @transform_1(%arg0: i32, %arg1: i32) -> (i32, i32) {
    %c0_i32 = arith.constant 0 : i32
    %c0_i32_0 = arith.constant 0 : i32
    %c0_i32_1 = arith.constant 0 : i32
    return %c0_i32, %c0_i32_0 : i32, i32
  }
  func.func @transform_2(%arg0: i32, %arg1: i32) -> (i32, i32, i32, i32) {
    %c0_i32 = arith.constant 0 : i32
    %c0_i32_0 = arith.constant 0 : i32
    %c0_i32_1 = arith.constant 0 : i32
    return %arg0, %c0_i32, %arg1, %c0_i32_0 : i32, i32, i32, i32
  }
  func.func @transform_3(%arg0: i32, %arg1: i32) -> (i32, i32, i32, i32) {
    %c0_i32 = arith.constant 0 : i32
    %c0_i32_0 = arith.constant 0 : i32
    %c0_i32_1 = arith.constant 0 : i32
    return %arg0, %c0_i32, %arg1, %c0_i32_0 : i32, i32, i32, i32
  }
  func.func @transform_4(%arg0: i32, %arg1: i32) -> (i32, i32, i32, i32) {
    %c0_i32 = arith.constant 0 : i32
    %c0_i32_0 = arith.constant 0 : i32
    %c0_i32_1 = arith.constant 0 : i32
    return %arg0, %c0_i32, %arg1, %c0_i32_0 : i32, i32, i32, i32
  }
}

</mosaic_0001>

<llo_original>
// kernel: tpu_custom_call.1
$region0: #{tpu_custom_call.1}
  #allocation0 [shape = 'u32[]', space=smem, size = 0x4, offset = 0x4, fixed_abs, tag = 'smem constant byte address 0x4 - core index']
  #allocation1 [shape = 'u32[72,128]{1,0:T(1,128)}', space=vmem, size = 0x9000, scoped, tag = 'internal scratch']
  %s0 = inlined_call_operand.vmem [shape: f32[2,6,3], index: 0, kind: input, shape index: {}]
  %s1 = inlined_call_operand.vmem [shape: f32[3,6], index: 1, kind: input, shape index: {}]
  %s2 = inlined_call_operand.vmem [shape: f32[2,2,6,1], index: 2, kind: output, shape index: {0}]
  %s3 = inlined_call_operand.vmem [shape: f32[2,2,6,1], index: 3, kind: output, shape index: {1}]
  %s4 = inlined_call_operand.vmem [shape: f32[2,2,6,1], index: 4, kind: output, shape index: {2}]
  %5 = xla_tuple %s2, %s3, %s4
  %s6 = sld [smem:[#allocation0]]
  $region57: #{tpu_custom_call.1} parent=0
    _
  %s8 = ssub.s32 1, %s6
  %s9 = scalar_select 0, %s8, %s6
  loop: start=0, step=1, limit=4
  $region2: #{tpu_custom_call.1} parent=0 // loop_pre_header
    _
  $region3: #{tpu_custom_call.1} parent=0 // loop_header
    %s11 = sphi 0, %s15
    %p12 = scmp.ge.s32.totalorder %s11, 4
    %s18 = sphi 0, %s30
    %s19 = sphi 0, %s26
    %s20 = sphi 0, %s18
    %s21 = sphi 0, %s19
    %s22 = sphi 0, %s20
    %s23 = sphi 0, %s21
    %s35 = sphi 0, %s37
    %s38 = sphi 0, %s35
    %s39 = sphi 0, %s38
    %s55 = sphi 0, %s39
    %s59 = sphi 0, %s59
    %s61 = sphi 0, %s59
    %s62 = sphi 0, %s61
    %s76 = sphi 0, %s62
    %s84 = sphi 0, %s86
    %s87 = sphi 0, %s84
    %s88 = sphi 0, %s87
    %s104 = sphi 0, %s88
    %s112 = sphi 0, %s114
    %s115 = sphi 0, %s112
    %s116 = sphi 0, %s115
    %s132 = sphi 0, %s116
    %s140 = sphi 0, %s142
    %s143 = sphi 0, %s140
    %s144 = sphi 0, %s143
    %s160 = sphi 0, %s144
  $region4: #{tpu_custom_call.1} parent=0 // loop_header_branch
    %14 = sbr.rel (%p12) target = $region8
  $region5: #{tpu_custom_call.1} parent=0 // loop_body
    %s16 = ssub.s32 %s11, 1
    %s17 = ssub.s32 %s11, 2
    %s24 = sadd.s32 1, %s19
    %p25 = scmp.ge.s32.totalorder %s24, 1
    %s26 = scalar_select %p25, 0, %s24
    %s27 = sadd.s32 1, %s18
    %s28 = scalar_select %p25, %s27, %s18
    %p29 = scmp.ge.s32.totalorder %s28, 2
    %s30 = scalar_select %p29, 0, %s28
    %s31 = ssub.s32 %s18, %s30
    %s32 = ssub.s32 %s19, %s26
    %s33 = sor.u32 %s31, %s32
    %p34 = scmp.eq.s32.totalorder %s33, 0
    %s36 = sadd.s32 %s35, 1
    %s37 = scalar_select %p34, %s35, %s36
    %p40 = pneg %p34
    %p41 = scmp.eq.s32.totalorder %s11, 1
    %p42 = por %p40, %p41
    %p43 = scmp.ne.s32.totalorder %s35, %s38
    %p44 = scmp.eq.s32.totalorder %s11, 0
    %p45 = por %p43, %p44
    %p46 = scmp.ne.s32.totalorder %s35, %s38
    %p47 = scmp.eq.s32.totalorder %s16, 1
    %p48 = por %p46, %p47
    %p49 = scmp.ne.s32.totalorder %s38, %s39
    %p50 = scmp.eq.s32.totalorder %s16, 0
    %p51 = por %p49, %p50
    %p52 = scmp.ne.s32.totalorder %s38, %s39
    %p53 = scmp.eq.s32.totalorder %s17, 1
    %p54 = por %p52, %p53
    %p56 = scmp.ne.s32.totalorder %s39, %s55
    %p57 = scmp.eq.s32.totalorder %s17, 0
    %p58 = por %p56, %p57
    %s60 = sadd.s32 %s59, 1
    %p63 = scmp.eq.s32.totalorder %s11, 1
    %p64 = scmp.ne.s32.totalorder %s59, %s61
    %p65 = scmp.eq.s32.totalorder %s11, 0
    %p66 = por %p64, %p65
    %p67 = scmp.ne.s32.totalorder %s59, %s61
    %p68 = scmp.eq.s32.totalorder %s16, 1
    %p69 = por %p67, %p68
    %p70 = scmp.ne.s32.totalorder %s61, %s62
    %p71 = scmp.eq.s32.totalorder %s16, 0
    %p72 = por %p70, %p71
    %p73 = scmp.ne.s32.totalorder %s61, %s62
    %p74 = scmp.eq.s32.totalorder %s17, 1
    %p75 = por %p73, %p74
    %p77 = scmp.ne.s32.totalorder %s62, %s76
    %p78 = scmp.eq.s32.totalorder %s17, 0
    %p79 = por %p77, %p78
    %s80 = ssub.s32 %s18, %s30
    %s81 = ssub.s32 %s19, %s26
    %s82 = sor.u32 %s80, %s81
    %p83 = scmp.eq.s32.totalorder %s82, 0
    %s85 = sadd.s32 %s84, 1
    %s86 = scalar_select %p83, %s84, %s85
    %p89 = pneg %p83
    %p90 = scmp.eq.s32.totalorder %s11, 1
    %p91 = por %p89, %p90
    %p92 = scmp.ne.s32.totalorder %s84, %s87
    %p93 = scmp.eq.s32.totalorder %s11, 0
    %p94 = por %p92, %p93
    %p95 = scmp.ne.s32.totalorder %s84, %s87
    %p96 = scmp.eq.s32.totalorder %s16, 1
    %p97 = por %p95, %p96
    %p98 = scmp.ne.s32.totalorder %s87, %s88
    %p99 = scmp.eq.s32.totalorder %s16, 0
    %p100 = por %p98, %p99
    %p101 = scmp.ne.s32.totalorder %s87, %s88
    %p102 = scmp.eq.s32.totalorder %s17, 1
    %p103 = por %p101, %p102
    %p105 = scmp.ne.s32.totalorder %s88, %s104
    %p106 = scmp.eq.s32.totalorder %s17, 0
    %p107 = por %p105, %p106
    %s108 = ssub.s32 %s18, %s30
    %s109 = ssub.s32 %s19, %s26
    %s110 = sor.u32 %s108, %s109
    %p111 = scmp.eq.s32.totalorder %s110, 0
    %s113 = sadd.s32 %s112, 1
    %s114 = scalar_select %p111, %s112, %s113
    %p117 = pneg %p111
    %p118 = scmp.eq.s32.totalorder %s11, 1
    %p119 = por %p117, %p118
    %p120 = scmp.ne.s32.totalorder %s112, %s115
    %p121 = scmp.eq.s32.totalorder %s11, 0
    %p122 = por %p120, %p121
    %p123 = scmp.ne.s32.totalorder %s112, %s115
    %p124 = scmp.eq.s32.totalorder %s16, 1
    %p125 = por %p123, %p124
    %p126 = scmp.ne.s32.totalorder %s115, %s116
    %p127 = scmp.eq.s32.totalorder %s16, 0
    %p128 = por %p126, %p127
    %p129 = scmp.ne.s32.totalorder %s115, %s116
    %p130 = scmp.eq.s32.totalorder %s17, 1
    %p131 = por %p129, %p130
    %p133 = scmp.ne.s32.totalorder %s116, %s132
    %p134 = scmp.eq.s32.totalorder %s17, 0
    %p135 = por %p133, %p134
    %s136 = ssub.s32 %s18, %s30
    %s137 = ssub.s32 %s19, %s26
    %s138 = sor.u32 %s136, %s137
    %p139 = scmp.eq.s32.totalorder %s138, 0
    %s141 = sadd.s32 %s140, 1
    %s142 = scalar_select %p139, %s140, %s141
    %p145 = pneg %p139
    %p146 = scmp.eq.s32.totalorder %s11, 1
    %p147 = por %p145, %p146
    %p148 = scmp.ne.s32.totalorder %s140, %s143
    %p149 = scmp.eq.s32.totalorder %s11, 0
    %p150 = por %p148, %p149
    %p151 = scmp.ne.s32.totalorder %s140, %s143
    %p152 = scmp.eq.s32.totalorder %s16, 1
    %p153 = por %p151, %p152
    %p154 = scmp.ne.s32.totalorder %s143, %s144
    %p155 = scmp.eq.s32.totalorder %s16, 0
    %p156 = por %p154, %p155
    %p157 = scmp.ne.s32.totalorder %s143, %s144
    %p158 = scmp.eq.s32.totalorder %s17, 1
    %p159 = por %p157, %p158
    %p161 = scmp.ne.s32.totalorder %s144, %s160
    %p162 = scmp.eq.s32.totalorder %s17, 0
    %p163 = por %p161, %p162
    %p164 = scmp.le.s32.totalorder 1, %s11
    %p165 = scmp.lt.s32.totalorder %s11, 3
    %p166 = pnand %p164, %p165
    %p167 = pneg %p166
    // Predicated region
    $region9: #{tpu_custom_call.1} parent=5 // pred_check
      _
    $region10: #{tpu_custom_call.1} parent=5 // pred_check_branch
      %169 = sbr.rel (%p166) target = $region12
    $region11: #{tpu_custom_call.1} parent=5 // pred_region
      %s170 = ssub.s32 %s11, 1
      // Predicated region
      $region13: #{tpu_custom_call.1} parent=11 // pred_check
        %p171 = pneg %p72
      $region14: #{tpu_custom_call.1} parent=11 // pred_check_branch
        %173 = sbr.rel (%p171) target = $region16
      $region15: #{tpu_custom_call.1} parent=11 // pred_region
        _
      $region16: #{tpu_custom_call.1} parent=11 // pred_fallthru
        _
    $region12: #{tpu_custom_call.1} parent=5 // pred_fallthru
      _
    %p174 = scmp.lt.s32.totalorder %s11, 2
    // Predicated region
    $region17: #{tpu_custom_call.1} parent=5 // pred_check
      %p175 = pneg %p174
    $region18: #{tpu_custom_call.1} parent=5 // pred_check_branch
      %177 = sbr.rel (%p175) target = $region20
    $region19: #{tpu_custom_call.1} parent=5 // pred_region
      // Predicated region
      $region21: #{tpu_custom_call.1} parent=19 // pred_check
        %p178 = pneg %p45
      $region22: #{tpu_custom_call.1} parent=19 // pred_check_branch
        %180 = sbr.rel (%p178) target = $region24
      $region23: #{tpu_custom_call.1} parent=19 // pred_region
        %p181 = scmp.lt.s32.totalorder %s18, 1
        %s182 = scalar_select %p181, %s18, 1
        %p183 = scmp.lt.s32.totalorder %s19, 0
        %s184 = scalar_select %p183, %s19, 0
        %s185 = sadd.s32 %s184, %s182
        %s186 = smul.addr %s185, 8
        %s187 = scalar_lea.vmem %s0, %s186
      $region24: #{tpu_custom_call.1} parent=19 // pred_fallthru
        _
    $region20: #{tpu_custom_call.1} parent=5 // pred_fallthru
      _
    %p188 = scmp.le.s32.totalorder 1, %s11
    %p189 = scmp.lt.s32.totalorder %s11, 3
    %p190 = pnand %p188, %p189
    %p191 = pneg %p190
    // Predicated region
    $region25: #{tpu_custom_call.1} parent=5 // pred_check
      _
    $region26: #{tpu_custom_call.1} parent=5 // pred_check_branch
      %193 = sbr.rel (%p190) target = $region28
    $region27: #{tpu_custom_call.1} parent=5 // pred_region
      %s194 = ssub.s32 %s11, 1
      %p195 = scmp.lt.s32.totalorder %s20, 1
      %s196 = scalar_select %p195, %s20, 1
      %p197 = scmp.lt.s32.totalorder %s21, 0
      %s198 = scalar_select %p197, %s21, 0
      %s199 = sadd.s32 %s198, %s196
      %s200 = smul.addr %s199, 8
      %s201 = scalar_lea.vmem %s0, %s200
      %p202 = pneg %p51
      %p203 = pneg %p48
      %p204 = pneg %p72
      %p205 = pneg %p69
      %p206 = pneg %p100
      %p207 = pneg %p97
      %p208 = scmp.lt.s32.totalorder %s20, 1
      %s209 = scalar_select %p208, %s20, 1
      %p210 = scmp.lt.s32.totalorder %s21, 0
      %s211 = scalar_select %p210, %s21, 0
      %s212 = smul.addr %s209, 2
      %s213 = sadd.s32 %s211, %s212
      %s214 = smul.addr %s213, 8
      %s215 = scalar_lea.vmem %s2, %s214
      %p216 = pneg %p128
      %p217 = pneg %p125
      %p218 = scmp.lt.s32.totalorder %s20, 1
      %s219 = scalar_select %p218, %s20, 1
      %p220 = scmp.lt.s32.totalorder %s21, 0
      %s221 = scalar_select %p220, %s21, 0
      %s222 = smul.addr %s219, 2
      %s223 = sadd.s32 %s221, %s222
      %s224 = smul.addr %s223, 8
      %s225 = scalar_lea.vmem %s3, %s224
      %p226 = pneg %p156
      %p227 = pneg %p153
      %p228 = scmp.lt.s32.totalorder %s20, 1
      %s229 = scalar_select %p228, %s20, 1
      %p230 = scmp.lt.s32.totalorder %s21, 0
      %s231 = scalar_select %p230, %s21, 0
      %s232 = smul.addr %s229, 2
      %s233 = sadd.s32 %s231, %s232
      %s234 = smul.addr %s233, 8
      %s235 = scalar_lea.vmem %s4, %s234
      %p236 = scmp.lt.s32.totalorder %s20, 1
      %s237 = scalar_select %p236, %s20, 1
      %p238 = scmp.lt.s32.totalorder %s21, 0
      %s239 = scalar_select %p238, %s21, 0
      %s240 = sadd.s32 %s239, %s237
      %s241 = smul.addr %s240, 8
      %s242 = scalar_lea.vmem %s0, %s241
      %p243 = scmp.lt.s32.totalorder %s20, 1
      %s244 = scalar_select %p243, %s20, 1
      %p245 = scmp.lt.s32.totalorder %s21, 0
      %s246 = scalar_select %p245, %s21, 0
      %s247 = smul.addr %s244, 2
      %s248 = sadd.s32 %s246, %s247
      %s249 = smul.addr %s248, 8
      %s250 = scalar_lea.vmem %s2, %s249
      %p251 = scmp.lt.s32.totalorder %s20, 1
      %s252 = scalar_select %p251, %s20, 1
      %p253 = scmp.lt.s32.totalorder %s21, 0
      %s254 = scalar_select %p253, %s21, 0
      %s255 = smul.addr %s252, 2
      %s256 = sadd.s32 %s254, %s255
      %s257 = smul.addr %s256, 8
      %s258 = scalar_lea.vmem %s3, %s257
      %p259 = scmp.lt.s32.totalorder %s20, 1
      %s260 = scalar_select %p259, %s20, 1
      %p261 = scmp.lt.s32.totalorder %s21, 0
      %s262 = scalar_select %p261, %s21, 0
      %s263 = smul.addr %s260, 2
      %s264 = sadd.s32 %s262, %s263
      %s265 = smul.addr %s264, 8
      %s266 = scalar_lea.vmem %s4, %s265
      %v267 = vld [vmem:[%s242] sm:$0x3f]
      %v268 = vld [vmem:[%s1] sm:$0x7]
      %vm269 = vcmask 23552
      %v271 = vsel %vm269, %v267, 0
      %vm273 = vcmask 1042432
      %v275 = vsel %vm273, %v268, 0
      %277 = vmatpush.msra.mxu0 0.0
      %278 = vmatpush.msra.mxu0 0.0
      %279 = vmatpush.msra.mxu0 0.0
      %280 = vmatpush.msra.mxu0 0.0
      %281 = vmatpush.msra.mxu0 0.0
      %282 = vmatpush.msra.mxu0 0.0
      %283 = vmatpush.msra.mxu0 0.0
      %284 = vmatpush.msra.mxu0 0.0
      %285 = vmatpush.msra.mxu0 0.0
      %286 = vmatpush.msra.mxu0 0.0
      %287 = vmatpush.msra.mxu0 0.0
      %288 = vmatpush.msra.mxu0 0.0
      %289 = vmatpush.msra.mxu0 0.0
      %290 = vmatpush.msra.mxu0 0.0
      %291 = vmatpush.msra.mxu0 0.0
      %292 = vmatpush.msra.mxu0 %v275
      %293 = vmatmul.f32.gmra.mxu0 %v271
      %v294 = vpop.f32.mrf.mxu0
      %v295 = vadd.f32 0.0, %v294
      %296 = vdwg.mxu0
      %vm297 = vcmask 5120
      %298 = vst.msk [vmem:[%s250] sm:$0x3f] %vm297, %v295
      %300 = vrot.lane.b32.xlu0 %v295, 127
      %v301 = vpop.permute.xlu0 %300
      %s303 = scalar_lea.vmem %s250, 8
      %304 = vst.msk [vmem:[%s303] sm:$0x3f] %vm297, %v301
      %305 = vrot.lane.b32.xlu0 %v295, 126
      %v306 = vpop.permute.xlu0 %305
      %308 = vst.msk [vmem:[%s258] sm:$0x3f] %vm297, %v306
      %309 = vrot.lane.b32.xlu0 %v295, 125
      %v310 = vpop.permute.xlu0 %309
      %s312 = scalar_lea.vmem %s258, 8
      %313 = vst.msk [vmem:[%s312] sm:$0x3f] %vm297, %v310
      %314 = vrot.lane.b32.xlu0 %v295, 124
      %v315 = vpop.permute.xlu0 %314
      %317 = vst.msk [vmem:[%s266] sm:$0x3f] %vm297, %v315
      %318 = vrot.lane.b32.xlu0 %v295, 123
      %v319 = vpop.permute.xlu0 %318
      %s321 = scalar_lea.vmem %s266, 8
      %322 = vst.msk [vmem:[%s321] sm:$0x3f] %vm297, %v319
      %p323 = scmp.lt.s32.totalorder %s20, 1
      %s324 = scalar_select %p323, %s20, 1
      %p325 = scmp.lt.s32.totalorder %s21, 0
      %s326 = scalar_select %p325, %s21, 0
      %s327 = smul.addr %s324, 2
      %s328 = sadd.s32 %s326, %s327
      %s329 = smul.addr %s328, 8
      %s330 = scalar_lea.vmem %s2, %s329
      %p331 = scmp.lt.s32.totalorder %s20, 1
      %s332 = scalar_select %p331, %s20, 1
      %p333 = scmp.lt.s32.totalorder %s21, 0
      %s334 = scalar_select %p333, %s21, 0
      %s335 = smul.addr %s332, 2
      %s336 = sadd.s32 %s334, %s335
      %s337 = smul.addr %s336, 8
      %s338 = scalar_lea.vmem %s3, %s337
      %p339 = scmp.lt.s32.totalorder %s20, 1
      %s340 = scalar_select %p339, %s20, 1
      %p341 = scmp.lt.s32.totalorder %s21, 0
      %s342 = scalar_select %p341, %s21, 0
      %s343 = smul.addr %s340, 2
      %s344 = sadd.s32 %s342, %s343
      %s345 = smul.addr %s344, 8
      %s346 = scalar_lea.vmem %s4, %s345
      // Predicated region
      $region29: #{tpu_custom_call.1} parent=27 // pred_check
        %p347 = pneg %p97
      $region30: #{tpu_custom_call.1} parent=27 // pred_check_branch
        %349 = sbr.rel (%p347) target = $region32
      $region31: #{tpu_custom_call.1} parent=27 // pred_region
        _
      $region32: #{tpu_custom_call.1} parent=27 // pred_fallthru
        _
      // Predicated region
      $region33: #{tpu_custom_call.1} parent=27 // pred_check
        %p350 = pneg %p125
      $region34: #{tpu_custom_call.1} parent=27 // pred_check_branch
        %352 = sbr.rel (%p350) target = $region36
      $region35: #{tpu_custom_call.1} parent=27 // pred_region
        _
      $region36: #{tpu_custom_call.1} parent=27 // pred_fallthru
        _
      // Predicated region
      $region37: #{tpu_custom_call.1} parent=27 // pred_check
        %p353 = pneg %p153
      $region38: #{tpu_custom_call.1} parent=27 // pred_check_branch
        %355 = sbr.rel (%p353) target = $region40
      $region39: #{tpu_custom_call.1} parent=27 // pred_region
        _
      $region40: #{tpu_custom_call.1} parent=27 // pred_fallthru
        _
    $region28: #{tpu_custom_call.1} parent=5 // pred_fallthru
      _
    %p356 = scmp.le.s32.totalorder 2, %s11
    // Predicated region
    $region41: #{tpu_custom_call.1} parent=5 // pred_check
      %p357 = pneg %p356
    $region42: #{tpu_custom_call.1} parent=5 // pred_check_branch
      %359 = sbr.rel (%p357) target = $region44
    $region43: #{tpu_custom_call.1} parent=5 // pred_region
      %s360 = ssub.s32 %s11, 2
      // Predicated region
      $region45: #{tpu_custom_call.1} parent=43 // pred_check
        %p361 = pneg %p103
      $region46: #{tpu_custom_call.1} parent=43 // pred_check_branch
        %363 = sbr.rel (%p361) target = $region48
      $region47: #{tpu_custom_call.1} parent=43 // pred_region
        %p364 = scmp.lt.s32.totalorder %s22, 1
        %s365 = scalar_select %p364, %s22, 1
        %p366 = scmp.lt.s32.totalorder %s23, 0
        %s367 = scalar_select %p366, %s23, 0
        %s368 = smul.addr %s365, 2
        %s369 = sadd.s32 %s367, %s368
        %s370 = smul.addr %s369, 8
        %s371 = scalar_lea.vmem %s2, %s370
      $region48: #{tpu_custom_call.1} parent=43 // pred_fallthru
        _
      // Predicated region
      $region49: #{tpu_custom_call.1} parent=43 // pred_check
        %p372 = pneg %p131
      $region50: #{tpu_custom_call.1} parent=43 // pred_check_branch
        %374 = sbr.rel (%p372) target = $region52
      $region51: #{tpu_custom_call.1} parent=43 // pred_region
        %p375 = scmp.lt.s32.totalorder %s22, 1
        %s376 = scalar_select %p375, %s22, 1
        %p377 = scmp.lt.s32.totalorder %s23, 0
        %s378 = scalar_select %p377, %s23, 0
        %s379 = smul.addr %s376, 2
        %s380 = sadd.s32 %s378, %s379
        %s381 = smul.addr %s380, 8
        %s382 = scalar_lea.vmem %s3, %s381
      $region52: #{tpu_custom_call.1} parent=43 // pred_fallthru
        _
      // Predicated region
      $region53: #{tpu_custom_call.1} parent=43 // pred_check
        %p383 = pneg %p159
      $region54: #{tpu_custom_call.1} parent=43 // pred_check_branch
        %385 = sbr.rel (%p383) target = $region56
      $region55: #{tpu_custom_call.1} parent=43 // pred_region
        %p386 = scmp.lt.s32.totalorder %s22, 1
        %s387 = scalar_select %p386, %s22, 1
        %p388 = scmp.lt.s32.totalorder %s23, 0
        %s389 = scalar_select %p388, %s23, 0
        %s390 = smul.addr %s387, 2
        %s391 = sadd.s32 %s389, %s390
        %s392 = smul.addr %s391, 8
        %s393 = scalar_lea.vmem %s4, %s392
      $region56: #{tpu_custom_call.1} parent=43 // pred_fallthru
        _
    $region44: #{tpu_custom_call.1} parent=5 // pred_fallthru
      _
  $region6: #{tpu_custom_call.1} parent=0 // loop_footer
    %s15 = sadd.s32 1, %s11
  $region7: #{tpu_custom_call.1} parent=0 // loop_footer_branch
    %10 = sbr.rel target = $region3
  $region8: #{tpu_custom_call.1} parent=0 // loop_exit
    _

</llo_original>
